<compile_context>
chip_gen: v7x
topology: tpu7x:2x2x1
jax: 0.10.0
libtpu: 0.0.40
codegen_flags: <defaults>
</compile_context>

<pallas_src>
import jax
import jax.numpy as jnp
from jax import lax
from jax.experimental import pallas as pl
from jax.experimental.pallas import tpu as pltpu


_SMALL_K_THRESHOLD = 64           # below this the VPU broadcast path wins
_SMALL_N_LIMIT = 128              # keep the SMEM weight table small
_VMEM_BUDGET = 24 * 1024 * 1024   # MXU-path tile budget (v7x-safe)


def _round_up(x, m):
    return ((x + m - 1) // m) * m


# ---------------------------------------------------------------------------
# Small-K path (shipped Branch_Bypass shape: in_dim=1, out_dim=4) — lane dense.
# ---------------------------------------------------------------------------
def _small_k_kernel(w_ref, b_ref, x_ref, o_ref):
    # w_ref: SMEM (N, K) f32   b_ref: SMEM (N,) f32
    # x_ref: VMEM (K, tr, 128) o_ref: VMEM (N, tr, 128)
    n_out = o_ref.shape[0]
    k_in = x_ref.shape[0]
    x = x_ref[...].astype(jnp.float32)
    for n in range(n_out):                       # unrolled at trace time
        acc = x[0] * w_ref[n, 0]
        for kk in range(1, k_in):
            acc = acc + x[kk] * w_ref[n, kk]
        o_ref[n] = (acc + b_ref[n]).astype(o_ref.dtype)


def _small_k_forward(x2d, weight, bias):
    m, k = x2d.shape
    n = weight.shape[0]
    out_dtype = x2d.dtype

    # Lane-dense slab: per-feature rows of 128 lanes.  For the shipped K=1
    # case the transpose below is a free reshape; the pad only touches x
    # (the small side of the traffic) and only when m % 128 != 0.
    m128 = _round_up(m, 128)
    x_t = x2d.T                                          # (K, M)
    if m128 != m:
        x_t = jnp.pad(x_t, ((0, 0), (0, m128 - m)))
    r = m128 // 128
    x_slab = x_t.reshape(k, r, 128)

    w_f32 = weight.astype(jnp.float32)                   # (N, K) -> SMEM
    b_f32 = bias.astype(jnp.float32)                     # (N,)   -> SMEM

    # Biggest row-block that keeps the double-buffered VMEM footprint modest.
    if r <= 8:
        tr = r
    else:
        budget_rows = (8 * 1024 * 1024) // ((k + n) * 128 * 4 * 2)
        tr = max(8, min(1024, (budget_rows // 8) * 8))
        tr = min(tr, _round_up(r, 8))
    grid = (pl.cdiv(r, tr),)

    itemsize = jnp.dtype(out_dtype).itemsize
    cost = pl.CostEstimate(
        flops=2 * m * k * n,
        transcendentals=0,
        bytes_accessed=int(m128 * k * itemsize + m128 * n * itemsize
                           + (n * k + n) * 4),
    )

    out_planes = pl.pallas_call(
        _small_k_kernel,
        out_shape=jax.ShapeDtypeStruct((n, r, 128), out_dtype),
        grid=grid,
        in_specs=[
            pl.BlockSpec(memory_space=pltpu.MemorySpace.SMEM),   # weight
            pl.BlockSpec(memory_space=pltpu.MemorySpace.SMEM),   # bias
            pl.BlockSpec((k, tr, 128), lambda i: (0, i, 0)),     # x slab
        ],
        out_specs=pl.BlockSpec((n, tr, 128), lambda i: (0, i, 0)),
        compiler_params=pltpu.CompilerParams(
            dimension_semantics=("parallel",)),
        cost_estimate=cost,
    )(w_f32, b_f32, x_slab)

    # One cheap XLA transpose restores row-major (M, N).
    return out_planes.reshape(n, m128)[:, :m].T


# ---------------------------------------------------------------------------
# General path: tiled MXU matmul (weight pre-transposed to [K, N]).
# ---------------------------------------------------------------------------
def _single_step_kernel(x_ref, w_ref, b_ref, o_ref):
    # Whole K in one tile: straight MXU matmul + bias, no accumulator.
    o_ref[...] = (jnp.dot(x_ref[...], w_ref[...],
                          preferred_element_type=jnp.float32)
                  + b_ref[...]).astype(o_ref.dtype)


def _multi_step_kernel(x_ref, w_ref, b_ref, o_ref, acc_ref):
    @pl.when(pl.program_id(2) == 0)
    def _():
        acc_ref[...] = jnp.zeros_like(acc_ref)

    acc_ref[...] += jnp.dot(x_ref[...], w_ref[...],
                            preferred_element_type=jnp.float32)

    @pl.when(pl.program_id(2) == pl.num_programs(2) - 1)
    def _():
        o_ref[...] = (acc_ref[...] + b_ref[...]).astype(o_ref.dtype)


def _tiled_forward(x2d, weight, bias):
    m, k = x2d.shape
    n = weight.shape[0]
    out_dtype = x2d.dtype

    w_t = weight.T                                  # [K, N], one HBM pass,
    b2d = bias.reshape(1, n).astype(jnp.float32)    # amortized over M/tm reuse

    tm = min(512, _round_up(m, 8))
    tn = min(512, _round_up(n, 256))                # 256-mult for v6e/v7x MXU
    # v7x has 2 TensorCores: if the whole problem fits a single (i, j) tile,
    # split N so both cores get a "parallel" step (harmless on v5e/v6e).
    if pl.cdiv(m, tm) == 1 and pl.cdiv(n, tn) == 1 and n > 256:
        tn = _round_up(pl.cdiv(n, 2), 256)

    itemsize = jnp.dtype(out_dtype).itemsize
    w_itemsize = jnp.dtype(w_t.dtype).itemsize
    out_bytes = 2 * tm * tn * 4                         # dbl-buffered output
    per_k = 2 * (tm * itemsize + tn * w_itemsize)       # dbl-buffered x + w

    if out_bytes + per_k * k <= _VMEM_BUDGET:
        # Full-K, single step along K: no accumulator scratch, no
        # init/finalize, and no K padding (block dim == full array dim).
        grid = (pl.cdiv(m, tm), pl.cdiv(n, tn))
        cost = pl.CostEstimate(
            flops=2 * m * k * n, transcendentals=0,
            bytes_accessed=int(grid[1] * m * k * itemsize
                               + grid[0] * k * n * w_itemsize
                               + m * n * itemsize + n * 4))
        return pl.pallas_call(
            _single_step_kernel,
            out_shape=jax.ShapeDtypeStruct((m, n), out_dtype),
            grid=grid,
            in_specs=[
                pl.BlockSpec((tm, k), lambda i, j: (i, 0)),
                pl.BlockSpec((k, tn), lambda i, j: (0, j)),
                pl.BlockSpec((1, tn), lambda i, j: (0, j)),
            ],
            out_specs=pl.BlockSpec((tm, tn), lambda i, j: (i, j)),
            compiler_params=pltpu.CompilerParams(
                dimension_semantics=("parallel", "parallel"),
                vmem_limit_bytes=32 * 1024 * 1024),
            cost_estimate=cost,
        )(x2d, w_t, b2d)

    # Huge-K fallback: tile K with a f32 VMEM accumulator.  K must be
    # zero-padded (garbage there would corrupt the accumulator).
    acc_bytes = tm * tn * 4
    tk = max(256,
             ((_VMEM_BUDGET - out_bytes - acc_bytes) // per_k) // 256 * 256)
    k_pad = _round_up(k, tk)
    x2d = jnp.pad(x2d, ((0, 0), (0, k_pad - k)))
    w_t = jnp.pad(w_t, ((0, k_pad - k), (0, 0)))
    grid = (pl.cdiv(m, tm), pl.cdiv(n, tn), k_pad // tk)
    cost = pl.CostEstimate(
        flops=2 * m * k * n, transcendentals=0,
        bytes_accessed=int(grid[1] * m * k_pad * itemsize
                           + grid[0] * k_pad * n * w_itemsize
                           + m * n * itemsize + n * 4))
    return pl.pallas_call(
        _multi_step_kernel,
        out_shape=jax.ShapeDtypeStruct((m, n), out_dtype),
        grid=grid,
        in_specs=[
            pl.BlockSpec((tm, tk), lambda i, j, kk: (i, kk)),
            pl.BlockSpec((tk, tn), lambda i, j, kk: (kk, j)),
            pl.BlockSpec((1, tn), lambda i, j, kk: (0, j)),
        ],
        out_specs=pl.BlockSpec((tm, tn), lambda i, j, kk: (i, j)),
        scratch_shapes=[pltpu.VMEM((tm, tn), jnp.float32)],
        compiler_params=pltpu.CompilerParams(
            dimension_semantics=("parallel", "parallel", "arbitrary"),
            vmem_limit_bytes=32 * 1024 * 1024),
        cost_estimate=cost,
    )(x2d, w_t, b2d)


# ---------------------------------------------------------------------------
# Public entry point.
# ---------------------------------------------------------------------------
def branch_bypass_forward(x, weight, bias):
    """Branch_Bypass forward: u = x @ weight.T + bias (PyTorch nn.Linear).

    x:      [..., in_dim]
    weight: [out_dim, in_dim]   (PyTorch layout)
    bias:   [out_dim]
    returns [..., out_dim]
    """
    in_dim = weight.shape[1]
    out_dim = weight.shape[0]
    lead_shape = x.shape[:-1]
    m = 1
    for d in lead_shape:
        m *= d

    x2d = x.reshape(m, in_dim)
    if in_dim < _SMALL_K_THRESHOLD and out_dim <= _SMALL_N_LIMIT:
        out = _small_k_forward(x2d, weight, bias)
    else:
        out = _tiled_forward(x2d, weight, bias)
    return out.reshape(*lead_shape, out_dim)


def init_branch_bypass_params(key, in_dim=1, out_dim=4, dtype=jnp.float32):
    """Deterministic init matching nn.Linear default (uniform ±1/sqrt(in_dim))."""
    k_w, k_b = jax.random.split(key)
    bound = 1.0 / (in_dim ** 0.5)
    weight = jax.random.uniform(k_w, (out_dim, in_dim), dtype=dtype,
                                minval=-bound, maxval=bound)
    bias = jax.random.uniform(k_b, (out_dim,), dtype=dtype,
                              minval=-bound, maxval=bound)
    return weight, bias


if __name__ == "__main__":
    key = jax.random.PRNGKey(0)
    k_x, k_p, k_x2, k_p2, k_x3, k_p3 = jax.random.split(key, 6)

    # 1) Shipped Branch_Bypass shape (in_dim=1, out_dim=4): lane-dense VPU path.
    in_dim, out_dim, batch = 1, 4, 8
    x = jax.random.normal(k_x, (batch, in_dim), dtype=jnp.float32)
    weight, bias = init_branch_bypass_params(k_p, in_dim=in_dim, out_dim=out_dim)
    u = jax.block_until_ready(branch_bypass_forward(x, weight, bias))
    u_ref = jnp.dot(x, weight.T, precision=lax.Precision.HIGHEST) + bias
    assert u.shape == (batch, out_dim)
    assert jnp.allclose(u, u_ref, atol=1e-5, rtol=1e-5)

    # 2) Non-default Linear shape on the single-K-step MXU path.
    in2, out2, batch2 = 128, 256, 64
    x2 = jax.random.normal(k_x2, (batch2, in2), dtype=jnp.float32)
    w2, b2 = init_branch_bypass_params(k_p2, in_dim=in2, out_dim=out2)
    u2 = jax.block_until_ready(branch_bypass_forward(x2, w2, b2))
    u2_ref = jnp.dot(x2, w2.T, precision=lax.Precision.HIGHEST) + b2
    assert u2.shape == (batch2, out2)
    assert jnp.allclose(u2, u2_ref, atol=2e-2, rtol=2e-2)

    # 3) Awkward (ragged) shape exercising Pallas block masking in M and N
    #    and a full-K tile that is not a multiple of 128.
    in3, out3, batch3 = 96, 200, 100
    x3 = jax.random.normal(k_x3, (batch3, in3), dtype=jnp.float32)
    w3, b3 = init_branch_bypass_params(k_p3, in_dim=in3, out_dim=out3)
    u3 = jax.block_until_ready(branch_bypass_forward(x3, w3, b3))
    u3_ref = jnp.dot(x3, w3.T, precision=lax.Precision.HIGHEST) + b3
    assert u3.shape == (batch3, out3)
    assert jnp.allclose(u3, u3_ref, atol=2e-2, rtol=2e-2)

    print("KERNEL_OK")
</pallas_src>

<mosaic_0001>
module attributes {stable_mosaic.version = 11 : i64} {
  func.func @_small_k_kernel(%arg0: i32, %arg1: memref<4x1xf32, #tpu.memory_space<smem>>, %arg2: memref<4xf32, #tpu.memory_space<smem>>, %arg3: memref<1x1x128xf32, #tpu.memory_space<vmem>>, %arg4: memref<4x1x128xf32, #tpu.memory_space<vmem>>) attributes {dimension_semantics = [#tpu.dimension_semantics<parallel>], iteration_bounds = array<i64: 1>, scalar_prefetch = 0 : i64, scratch_operands = 0 : i64, tpu.core_type = #tpu.core_type<tc>, window_params = [{transform_indices = @transform_0, window_bounds = array<i64: 4, 1>}, {transform_indices = @transform_1, window_bounds = array<i64: 4>}, {transform_indices = @transform_2, window_bounds = array<i64: 1, 1, 128>}, {transform_indices = @transform_3, window_bounds = array<i64: 4, 1, 128>}]} {
    %c0 = arith.constant 0 : index
    %c0_0 = arith.constant 0 : index
    %c0_1 = arith.constant 0 : index
    %0 = vector.load %arg3[%c0, %c0_0, %c0_1] : memref<1x1x128xf32, #tpu.memory_space<vmem>>, vector<1x1x128xf32>
    %1 = vector.shape_cast %0 : vector<1x1x128xf32> to vector<1x128xf32>
    %c0_2 = arith.constant 0 : index
    %c0_3 = arith.constant 0 : index
    %2 = memref.load %arg1[%c0_2, %c0_3] : memref<4x1xf32, #tpu.memory_space<smem>>
    %3 = vector.broadcast %2 : f32 to vector<1x128xf32>
    %4 = arith.mulf %1, %3 : vector<1x128xf32>
    %c0_4 = arith.constant 0 : index
    %5 = memref.load %arg2[%c0_4] : memref<4xf32, #tpu.memory_space<smem>>
    %6 = vector.broadcast %5 : f32 to vector<1x128xf32>
    %7 = arith.addf %4, %6 : vector<1x128xf32>
    %c0_5 = arith.constant 0 : index
    %c0_6 = arith.constant 0 : index
    %c0_7 = arith.constant 0 : index
    %8 = vector.load %arg4[%c0_5, %c0_6, %c0_7] : memref<4x1x128xf32, #tpu.memory_space<vmem>>, vector<1x1x128xf32>
    %9 = vector.shape_cast %8 : vector<1x1x128xf32> to vector<1x128xf32>
    %10 = vector.shape_cast %7 : vector<1x128xf32> to vector<1x1x128xf32>
    tpu.vector_store %arg4[%c0_5, %c0_6, %c0_7], %10 {strides = array<i32>} : memref<4x1x128xf32, #tpu.memory_space<vmem>>, vector<1x1x128xf32>,
    %11 = vector.shape_cast %0 : vector<1x1x128xf32> to vector<1x128xf32>
    %c1 = arith.constant 1 : index
    %c0_8 = arith.constant 0 : index
    %12 = memref.load %arg1[%c1, %c0_8] : memref<4x1xf32, #tpu.memory_space<smem>>
    %13 = vector.broadcast %12 : f32 to vector<1x128xf32>
    %14 = arith.mulf %11, %13 : vector<1x128xf32>
    %c1_9 = arith.constant 1 : index
    %15 = memref.load %arg2[%c1_9] : memref<4xf32, #tpu.memory_space<smem>>
    %16 = vector.broadcast %15 : f32 to vector<1x128xf32>
    %17 = arith.addf %14, %16 : vector<1x128xf32>
    %c1_10 = arith.constant 1 : index
    %c0_11 = arith.constant 0 : index
    %c0_12 = arith.constant 0 : index
    %18 = vector.load %arg4[%c1_10, %c0_11, %c0_12] : memref<4x1x128xf32, #tpu.memory_space<vmem>>, vector<1x1x128xf32>
    %19 = vector.shape_cast %18 : vector<1x1x128xf32> to vector<1x128xf32>
    %20 = vector.shape_cast %17 : vector<1x128xf32> to vector<1x1x128xf32>
    tpu.vector_store %arg4[%c1_10, %c0_11, %c0_12], %20 {strides = array<i32>} : memref<4x1x128xf32, #tpu.memory_space<vmem>>, vector<1x1x128xf32>,
    %21 = vector.shape_cast %0 : vector<1x1x128xf32> to vector<1x128xf32>
    %c2 = arith.constant 2 : index
    %c0_13 = arith.constant 0 : index
    %22 = memref.load %arg1[%c2, %c0_13] : memref<4x1xf32, #tpu.memory_space<smem>>
    %23 = vector.broadcast %22 : f32 to vector<1x128xf32>
    %24 = arith.mulf %21, %23 : vector<1x128xf32>
    %c2_14 = arith.constant 2 : index
    %25 = memref.load %arg2[%c2_14] : memref<4xf32, #tpu.memory_space<smem>>
    %26 = vector.broadcast %25 : f32 to vector<1x128xf32>
    %27 = arith.addf %24, %26 : vector<1x128xf32>
    %c2_15 = arith.constant 2 : index
    %c0_16 = arith.constant 0 : index
    %c0_17 = arith.constant 0 : index
    %28 = vector.load %arg4[%c2_15, %c0_16, %c0_17] : memref<4x1x128xf32, #tpu.memory_space<vmem>>, vector<1x1x128xf32>
    %29 = vector.shape_cast %28 : vector<1x1x128xf32> to vector<1x128xf32>
    %30 = vector.shape_cast %27 : vector<1x128xf32> to vector<1x1x128xf32>
    tpu.vector_store %arg4[%c2_15, %c0_16, %c0_17], %30 {strides = array<i32>} : memref<4x1x128xf32, #tpu.memory_space<vmem>>, vector<1x1x128xf32>,
    %31 = vector.shape_cast %0 : vector<1x1x128xf32> to vector<1x128xf32>
    %c3 = arith.constant 3 : index
    %c0_18 = arith.constant 0 : index
    %32 = memref.load %arg1[%c3, %c0_18] : memref<4x1xf32, #tpu.memory_space<smem>>
    %33 = vector.broadcast %32 : f32 to vector<1x128xf32>
    %34 = arith.mulf %31, %33 : vector<1x128xf32>
    %c3_19 = arith.constant 3 : index
    %35 = memref.load %arg2[%c3_19] : memref<4xf32, #tpu.memory_space<smem>>
    %36 = vector.broadcast %35 : f32 to vector<1x128xf32>
    %37 = arith.addf %34, %36 : vector<1x128xf32>
    %c3_20 = arith.constant 3 : index
    %c0_21 = arith.constant 0 : index
    %c0_22 = arith.constant 0 : index
    %38 = vector.load %arg4[%c3_20, %c0_21, %c0_22] : memref<4x1x128xf32, #tpu.memory_space<vmem>>, vector<1x1x128xf32>
    %39 = vector.shape_cast %38 : vector<1x1x128xf32> to vector<1x128xf32>
    %40 = vector.shape_cast %37 : vector<1x128xf32> to vector<1x1x128xf32>
    tpu.vector_store %arg4[%c3_20, %c0_21, %c0_22], %40 {strides = array<i32>} : memref<4x1x128xf32, #tpu.memory_space<vmem>>, vector<1x1x128xf32>,
    return
  }
  func.func @transform_0(%arg0: i32) -> (i32, i32) {
    %c0_i32 = arith.constant 0 : i32
    %c0_i32_0 = arith.constant 0 : i32
    %c0_i32_1 = arith.constant 0 : i32
    return %c0_i32, %c0_i32_0 : i32, i32
  }
  func.func @transform_1(%arg0: i32) -> i32 {
    %c0_i32 = arith.constant 0 : i32
    %c0_i32_0 = arith.constant 0 : i32
    return %c0_i32 : i32
  }
  func.func @transform_2(%arg0: i32) -> (i32, i32, i32) {
    %c0_i32 = arith.constant 0 : i32
    %c0_i32_0 = arith.constant 0 : i32
    %c0_i32_1 = arith.constant 0 : i32
    return %c0_i32, %arg0, %c0_i32_0 : i32, i32, i32
  }
  func.func @transform_3(%arg0: i32) -> (i32, i32, i32) {
    %c0_i32 = arith.constant 0 : i32
    %c0_i32_0 = arith.constant 0 : i32
    %c0_i32_1 = arith.constant 0 : i32
    return %c0_i32, %arg0, %c0_i32_0 : i32, i32, i32
  }
}

</mosaic_0001>

<llo_original>
// kernel: tpu_custom_call.1
$region0: #{tpu_custom_call.1}
  #allocation0 [shape = 'u32[]', space=smem, size = 0x4, offset = 0x4, fixed_abs, tag = 'smem constant byte address 0x4 - core index']
  #allocation1 [shape = 'u32[144,128]{1,0:T(1,128)}', space=vmem, size = 0x12000, scoped, tag = 'internal scratch']
  %s0 = inlined_call_operand.vmem [shape: f32[4,1], index: 0, kind: input, shape index: {}]
  %s1 = inlined_call_operand.vmem [shape: f32[4], index: 1, kind: input, shape index: {}]
  %s2 = inlined_call_operand.vmem [shape: f32[1,1,128], index: 2, kind: input, shape index: {}]
  %s3 = inlined_call_operand.hbm [shape: f32[4,1,128], index: 3, kind: output, shape index: {}]
  %s4 = sld [smem:[#allocation0]]
  $region30: #{tpu_custom_call.1} parent=0
    _
  %s6 = ssub.s32 1, %s4
  %s7 = scalar_select 0, %s6, %s4
  $region1: #{tpu_custom_call.1} parent=0
    #allocation2 [shape = 'u8[2048]{0}', space=smem, size = 0x800, scoped, tag = 'input window, operand 0, single buffered']
    #allocation3 [shape = 's32[1]{0}', space=sflag, size = 0x4, scoped, tag = 'scoped memory for tpu_custom_call.1']
    #allocation4 [shape = 's32[1]{0}', space=sflag, size = 0x4, scoped, tag = 'scoped memory for tpu_custom_call.1']
    #allocation5 [shape = 'u8[512]{0}', space=smem, size = 0x200, scoped, tag = 'input window, operand 1, single buffered']
    #allocation6 [shape = 's32[1]{0}', space=sflag, size = 0x4, scoped, tag = 'scoped memory for tpu_custom_call.1']
    #allocation7 [shape = 'u8[2048]{0}', space=vmem, size = 0x800, scoped, tag = 'output window, operand 0, single buffered']
    %8 = vsyncpa [#allocation4], 0
    %9 = vsyncpa [#allocation6], 0
    %10 = vsyncpa [#allocation3], 0
    // Predicated region
    $region2: #{tpu_custom_call.1} parent=1 // pred_check
      _
    $region3: #{tpu_custom_call.1} parent=1 // pred_check_branch
      %12 = sbr.rel (0) target = $region5
    $region4: #{tpu_custom_call.1} parent=1 // pred_region
      %s14 = ssub.s32 64, 64
      %15 = vsyncadd [#allocation4], %s14
      %s17 = sshll.u32 %s0, 4
      %s18 = int_to_ptr.vmem [resolvable:$true] %s17
      %20 = dma.vmem_to_smem %s18, 64, [#allocation2], [#allocation4]
    $region5: #{tpu_custom_call.1} parent=1 // pred_fallthru
      _
    // Predicated region
    $region6: #{tpu_custom_call.1} parent=1 // pred_check
      _
    $region7: #{tpu_custom_call.1} parent=1 // pred_check_branch
      %22 = sbr.rel (0) target = $region9
    $region8: #{tpu_custom_call.1} parent=1 // pred_region
      %s24 = ssub.s32 16, 16
      %25 = vsyncadd [#allocation6], %s24
      %s27 = sshll.u32 %s1, 4
      %s28 = int_to_ptr.vmem [resolvable:$true] %s27
      %30 = dma.vmem_to_smem %s28, 16, [#allocation5], [#allocation6]
    $region9: #{tpu_custom_call.1} parent=1 // pred_fallthru
      _
    // Predicated region
    $region10: #{tpu_custom_call.1} parent=1 // pred_check
      _
    $region11: #{tpu_custom_call.1} parent=1 // pred_check_branch
      %32 = sbr.rel (0) target = $region13
    $region12: #{tpu_custom_call.1} parent=1 // pred_region
      _
    $region13: #{tpu_custom_call.1} parent=1 // pred_fallthru
      _
    // Predicated region
    $region14: #{tpu_custom_call.1} parent=1 // pred_check
      _
    $region15: #{tpu_custom_call.1} parent=1 // pred_check_branch
      %34 = sbr.rel (0) target = $region17
    $region16: #{tpu_custom_call.1} parent=1 // pred_region
      %35 = dma.done [#allocation4], 64
    $region17: #{tpu_custom_call.1} parent=1 // pred_fallthru
      _
    // Predicated region
    $region18: #{tpu_custom_call.1} parent=1 // pred_check
      _
    $region19: #{tpu_custom_call.1} parent=1 // pred_check_branch
      %37 = sbr.rel (0) target = $region21
    $region20: #{tpu_custom_call.1} parent=1 // pred_region
      %38 = dma.done [#allocation6], 16
    $region21: #{tpu_custom_call.1} parent=1 // pred_fallthru
      _
    %39 = sfence
    %v40 = vld [vmem:[%s2] sm:$0x1]
    %s41 = sld [smem:[#allocation2]]
    %v42 = vstv %s41
    %v43 = vmul.f32 %v40, %v42
    %s44 = sld [smem:[#allocation5]]
    %v45 = vstv %s44
    %v46 = vadd.f32 %v43, %v45
    %47 = vst [vmem:[#allocation7] sm:$0x1] %v46
    %s48 = sld [smem:[#allocation2 + $0x80]]
    %v49 = vstv %s48
    %v50 = vmul.f32 %v40, %v49
    %s51 = sld [smem:[#allocation5 + $0x1]]
    %v52 = vstv %s51
    %v53 = vadd.f32 %v50, %v52
    %s54 = scalar_lea.vmem [#allocation7], 1
    %55 = vst [vmem:[%s54] sm:$0x1] %v53
    %s56 = sld [smem:[#allocation2 + $0x100]]
    %v57 = vstv %s56
    %v58 = vmul.f32 %v40, %v57
    %s59 = sld [smem:[#allocation5 + $0x2]]
    %v60 = vstv %s59
    %v61 = vadd.f32 %v58, %v60
    %s62 = scalar_lea.vmem [#allocation7], 2
    %63 = vst [vmem:[%s62] sm:$0x1] %v61
    %s64 = sld [smem:[#allocation2 + $0x180]]
    %v65 = vstv %s64
    %v66 = vmul.f32 %v40, %v65
    %s67 = sld [smem:[#allocation5 + $0x3]]
    %v68 = vstv %s67
    %v69 = vadd.f32 %v66, %v68
    %s70 = scalar_lea.vmem [#allocation7], 3
    %71 = vst [vmem:[%s70] sm:$0x1] %v69
    // Predicated region
    $region22: #{tpu_custom_call.1} parent=1 // pred_check
      _
    $region23: #{tpu_custom_call.1} parent=1 // pred_check_branch
      %73 = sbr.rel (0) target = $region25
    $region24: #{tpu_custom_call.1} parent=1 // pred_region
      %s75 = ssub.s32 64, 64
      %76 = vsyncadd [#allocation3], %s75
      %s77 = sshll.u32 [#allocation7], 4
      %s78 = int_to_ptr.vmem [resolvable:$true] %s77
      %83 = dma.vmem_to_hbm [thread:$0]  %s78, 64, %s3, [#allocation3], 16, 16, 1
    $region25: #{tpu_custom_call.1} parent=1 // pred_fallthru
      _
    // Predicated region
    $region26: #{tpu_custom_call.1} parent=1 // pred_check
      _
    $region27: #{tpu_custom_call.1} parent=1 // pred_check_branch
      %85 = sbr.rel (0) target = $region29
    $region28: #{tpu_custom_call.1} parent=1 // pred_region
      %86 = dma.done [#allocation3], 64
    $region29: #{tpu_custom_call.1} parent=1 // pred_fallthru
      _
    %87 = vsyncpa [#allocation3], 1
    %88 = vsyncpa [#allocation4], 1
    %89 = vsyncpa [#allocation6], 1

</llo_original>
